<compile_context>
chip_gen: v7x
topology: tpu7x:2x2x1
jax: 0.10.0
libtpu: 0.0.40
codegen_flags: <defaults>
</compile_context>

<pallas_src>
import math
import functools

import jax
import jax.numpy as jnp
from jax.experimental import pallas as pl
from jax.experimental.pallas import tpu as pltpu


def _attention_kernel(q_ref, k_ref, v_ref, w_ref, o_ref, *, scale):
    q = q_ref[0]          # (tq, d)
    k = k_ref[0]          # (Lk, d)
    v = v_ref[0]          # (Lk, dv)

    # scores = Q K^T / sqrt(d)  -> MXU, f32 accumulation
    scores = jnp.dot(q, k.T, preferred_element_type=jnp.float32) * scale

    # numerically stable softmax along the key axis (full key axis is resident)
    m = jnp.max(scores, axis=-1, keepdims=True)
    e = jnp.exp(scores - m)
    denom = jnp.sum(e, axis=-1, keepdims=True)
    w = e / denom                                   # attention weights, f32

    w_ref[0] = w.astype(w_ref.dtype)

    # TODO(synk): training-mode dropout on the attention weights is omitted;
    # nn.Dropout is the identity in eval mode, which is what is implemented.
    o = jnp.dot(w.astype(v.dtype), v, preferred_element_type=jnp.float32)
    o_ref[0] = o.astype(o_ref.dtype)


def dot_product_attention(queries, keys, values, *, tq=256):
    """queries: (B, Lq, d); keys: (B, Lk, d); values: (B, Lk, dv).

    Returns (attention_weights (B, Lq, Lk), output (B, Lq, dv)).
    """
    B, Lq, d = queries.shape
    Lk = keys.shape[1]
    dv = values.shape[2]
    scale = 1.0 / math.sqrt(d)

    # Query tiling: amortize per-grid-step overhead with large tiles; fall back
    # to the full query axis when Lq is small/ragged (full-extent blocks are
    # always layout-legal).
    if Lq % tq != 0:
        tq = Lq
    grid = (B, Lq // tq)

    flops = 2 * B * Lq * Lk * d + 2 * B * Lq * Lk * dv
    bytes_accessed = (
        queries.size * queries.dtype.itemsize
        + keys.size * keys.dtype.itemsize
        + values.size * values.dtype.itemsize
        + B * Lq * Lk * 4                       # weights out (f32)
        + B * Lq * dv * queries.dtype.itemsize  # attention out
    )
    cost = pl.CostEstimate(
        flops=flops, transcendentals=B * Lq * Lk, bytes_accessed=bytes_accessed)

    kernel = functools.partial(_attention_kernel, scale=scale)

    weights, out = pl.pallas_call(
        kernel,
        out_shape=(
            jax.ShapeDtypeStruct((B, Lq, Lk), jnp.float32),    # attention weights
            jax.ShapeDtypeStruct((B, Lq, dv), queries.dtype),  # attention output
        ),
        grid_spec=pltpu.PrefetchScalarGridSpec(
            num_scalar_prefetch=0,
            grid=grid,
            in_specs=[
                pl.BlockSpec((1, tq, d), lambda b, i: (b, i, 0)),    # Q tile
                pl.BlockSpec((1, Lk, d), lambda b, i: (b, 0, 0)),    # K (full per batch)
                pl.BlockSpec((1, Lk, dv), lambda b, i: (b, 0, 0)),   # V (full per batch)
            ],
            out_specs=(
                pl.BlockSpec((1, tq, Lk), lambda b, i: (b, i, 0)),   # weights
                pl.BlockSpec((1, tq, dv), lambda b, i: (b, i, 0)),   # output
            ),
        ),
        compiler_params=pltpu.CompilerParams(
            dimension_semantics=("parallel", "parallel")),
        cost_estimate=cost,
    )(queries, keys, values)

    return weights, out


if __name__ == "__main__":
    # Small, lane-aligned shapes consistent with the module:
    # queries (B, Lq, d), keys (B, Lk, d), values (B, Lk, dv).
    batch, num_q, num_kv, d, dv = 2, 16, 128, 128, 128

    key = jax.random.PRNGKey(0)
    kq, kk, kv = jax.random.split(key, 3)
    q = jax.random.normal(kq, (batch, num_q, d), dtype=jnp.float32)
    k = jax.random.normal(kk, (batch, num_kv, d), dtype=jnp.float32)
    v = jax.random.normal(kv, (batch, num_kv, dv), dtype=jnp.float32)

    weights, out = dot_product_attention(q, k, v)
    weights, out = jax.block_until_ready((weights, out))

    # Pure-JAX reference (eval mode => dropout is identity).
    scores = jnp.einsum('bqd,bkd->bqk', q, k,
                        precision=jax.lax.Precision.HIGHEST) / math.sqrt(d)
    ref_w = jax.nn.softmax(scores, axis=-1)
    ref_o = jnp.einsum('bqk,bkv->bqv', ref_w, v,
                       precision=jax.lax.Precision.HIGHEST)

    assert weights.shape == (batch, num_q, num_kv)
    assert out.shape == (batch, num_q, dv)
    assert jnp.allclose(weights, ref_w, atol=2e-5, rtol=2e-5)
    assert jnp.allclose(out, ref_o, atol=2e-5, rtol=2e-5)

    print("KERNEL_OK")
</pallas_src>

<mosaic_0001>
module attributes {stable_mosaic.version = 11 : i64} {
  func.func @_attention_kernel(%arg0: i32, %arg1: i32, %arg2: memref<1x16x128xf32, #tpu.memory_space<vmem>>, %arg3: memref<1x128x128xf32, #tpu.memory_space<vmem>>, %arg4: memref<1x128x128xf32, #tpu.memory_space<vmem>>, %arg5: memref<1x16x128xf32, #tpu.memory_space<vmem>>, %arg6: memref<1x16x128xf32, #tpu.memory_space<vmem>>) attributes {dimension_semantics = [#tpu.dimension_semantics<parallel>, #tpu.dimension_semantics<parallel>], iteration_bounds = array<i64: 2, 1>, scalar_prefetch = 0 : i64, scratch_operands = 0 : i64, tpu.core_type = #tpu.core_type<tc>, window_params = [{transform_indices = @transform_0, window_bounds = array<i64: 1, 16, 128>}, {transform_indices = @transform_1, window_bounds = array<i64: 1, 128, 128>}, {transform_indices = @transform_2, window_bounds = array<i64: 1, 128, 128>}, {transform_indices = @transform_3, window_bounds = array<i64: 1, 16, 128>}, {transform_indices = @transform_4, window_bounds = array<i64: 1, 16, 128>}]} {
    %c0 = arith.constant 0 : index
    %c0_0 = arith.constant 0 : index
    %c0_1 = arith.constant 0 : index
    %0 = vector.load %arg2[%c0, %c0_0, %c0_1] : memref<1x16x128xf32, #tpu.memory_space<vmem>>, vector<1x16x128xf32>
    %1 = vector.shape_cast %0 : vector<1x16x128xf32> to vector<16x128xf32>
    %c0_2 = arith.constant 0 : index
    %c0_3 = arith.constant 0 : index
    %c0_4 = arith.constant 0 : index
    %2 = vector.load %arg3[%c0_2, %c0_3, %c0_4] : memref<1x128x128xf32, #tpu.memory_space<vmem>>, vector<1x128x128xf32>
    %3 = vector.shape_cast %2 : vector<1x128x128xf32> to vector<128x128xf32>
    %c0_5 = arith.constant 0 : index
    %c0_6 = arith.constant 0 : index
    %c0_7 = arith.constant 0 : index
    %4 = vector.load %arg4[%c0_5, %c0_6, %c0_7] : memref<1x128x128xf32, #tpu.memory_space<vmem>>, vector<1x128x128xf32>
    %5 = vector.shape_cast %4 : vector<1x128x128xf32> to vector<128x128xf32>
    %6 = tpu.transpose %3, [1, 0] : vector<128x128xf32> -> vector<128x128xf32>
    %cst = arith.constant dense<0.000000e+00> : vector<16x128xf32>
    %7 = tpu.matmul %1, %6, %cst {dimension_numbers = #tpu.dot_dimension_numbers<[1], [0], [0], [1], [0, 0, 1, 1], [], []>} : vector<16x128xf32>, vector<128x128xf32>, vector<16x128xf32> -> vector<16x128xf32>
    %cst_8 = arith.constant 0.0883883461 : f32
    %8 = vector.broadcast %cst_8 : f32 to vector<16x128xf32>
    %9 = arith.mulf %7, %8 : vector<16x128xf32>
    %cst_9 = arith.constant dense<0xFF800000> : vector<16xf32>
    %10 = vector.multi_reduction <maximumf>, %9, %cst_9 [1] : vector<16x128xf32> to vector<16xf32>
    %11 = vector.shape_cast %10 : vector<16xf32> to vector<16x1xf32>
    %12 = vector.broadcast %11 : vector<16x1xf32> to vector<16x128xf32>
    %13 = arith.subf %9, %12 : vector<16x128xf32>
    %14 = math.exp %13 : vector<16x128xf32>
    %cst_10 = arith.constant dense<0.000000e+00> : vector<16xf32>
    %15 = vector.multi_reduction <add>, %14, %cst_10 [1] : vector<16x128xf32> to vector<16xf32>
    %16 = vector.shape_cast %15 : vector<16xf32> to vector<16x1xf32>
    %17 = vector.broadcast %16 : vector<16x1xf32> to vector<16x128xf32>
    %18 = arith.divf %14, %17 : vector<16x128xf32>
    %c0_11 = arith.constant 0 : index
    %c0_12 = arith.constant 0 : index
    %c0_13 = arith.constant 0 : index
    %19 = vector.load %arg5[%c0_11, %c0_12, %c0_13] : memref<1x16x128xf32, #tpu.memory_space<vmem>>, vector<1x16x128xf32>
    %20 = vector.shape_cast %19 : vector<1x16x128xf32> to vector<16x128xf32>
    %21 = vector.shape_cast %18 : vector<16x128xf32> to vector<1x16x128xf32>
    tpu.vector_store %arg5[%c0_11, %c0_12, %c0_13], %21 {strides = array<i32>} : memref<1x16x128xf32, #tpu.memory_space<vmem>>, vector<1x16x128xf32>,
    %cst_14 = arith.constant dense<0.000000e+00> : vector<16x128xf32>
    %22 = tpu.matmul %18, %5, %cst_14 {dimension_numbers = #tpu.dot_dimension_numbers<[1], [0], [0], [1], [0, 0, 1, 1], [], []>} : vector<16x128xf32>, vector<128x128xf32>, vector<16x128xf32> -> vector<16x128xf32>
    %c0_15 = arith.constant 0 : index
    %c0_16 = arith.constant 0 : index
    %c0_17 = arith.constant 0 : index
    %23 = vector.load %arg6[%c0_15, %c0_16, %c0_17] : memref<1x16x128xf32, #tpu.memory_space<vmem>>, vector<1x16x128xf32>
    %24 = vector.shape_cast %23 : vector<1x16x128xf32> to vector<16x128xf32>
    %25 = vector.shape_cast %22 : vector<16x128xf32> to vector<1x16x128xf32>
    tpu.vector_store %arg6[%c0_15, %c0_16, %c0_17], %25 {strides = array<i32>} : memref<1x16x128xf32, #tpu.memory_space<vmem>>, vector<1x16x128xf32>,
    return
  }
  func.func @transform_0(%arg0: i32, %arg1: i32) -> (i32, i32, i32) {
    %c0_i32 = arith.constant 0 : i32
    %c0_i32_0 = arith.constant 0 : i32
    return %arg0, %arg1, %c0_i32 : i32, i32, i32
  }
  func.func @transform_1(%arg0: i32, %arg1: i32) -> (i32, i32, i32) {
    %c0_i32 = arith.constant 0 : i32
    %c0_i32_0 = arith.constant 0 : i32
    %c0_i32_1 = arith.constant 0 : i32
    return %arg0, %c0_i32, %c0_i32_0 : i32, i32, i32
  }
  func.func @transform_2(%arg0: i32, %arg1: i32) -> (i32, i32, i32) {
    %c0_i32 = arith.constant 0 : i32
    %c0_i32_0 = arith.constant 0 : i32
    %c0_i32_1 = arith.constant 0 : i32
    return %arg0, %c0_i32, %c0_i32_0 : i32, i32, i32
  }
  func.func @transform_3(%arg0: i32, %arg1: i32) -> (i32, i32, i32) {
    %c0_i32 = arith.constant 0 : i32
    %c0_i32_0 = arith.constant 0 : i32
    return %arg0, %arg1, %c0_i32 : i32, i32, i32
  }
  func.func @transform_4(%arg0: i32, %arg1: i32) -> (i32, i32, i32) {
    %c0_i32 = arith.constant 0 : i32
    %c0_i32_0 = arith.constant 0 : i32
    return %arg0, %arg1, %c0_i32 : i32, i32, i32
  }
}

</mosaic_0001>

<llo_original>
// kernel: tpu_custom_call.1
$region0: #{tpu_custom_call.1}
  #allocation0 [shape = 'u32[]', space=smem, size = 0x4, offset = 0x4, fixed_abs, tag = 'smem constant byte address 0x4 - core index']
  #allocation1 [shape = 'u32[144,128]{1,0:T(1,128)}', space=vmem, size = 0x12000, scoped, tag = 'internal scratch']
  %s0 = inlined_call_operand.hbm [shape: f32[2,16,128], index: 0, kind: input, shape index: {}]
  %s1 = inlined_call_operand.hbm [shape: f32[2,128,128], index: 1, kind: input, shape index: {}]
  %s2 = inlined_call_operand.hbm [shape: f32[2,128,128], index: 2, kind: input, shape index: {}]
  %s3 = inlined_call_operand.hbm [shape: f32[2,16,128], index: 3, kind: output, shape index: {0}]
  %s4 = inlined_call_operand.hbm [shape: f32[2,16,128], index: 4, kind: output, shape index: {1}]
  %5 = xla_tuple %s3, %s4
  %s6 = sld [smem:[#allocation0]]
  $region65: #{tpu_custom_call.1} parent=0
    _
  %s8 = ssub.s32 1, %s6
  %s9 = scalar_select 0, %s8, %s6
  $region1: #{tpu_custom_call.1} parent=0
    #allocation2 [shape = 'u8[16384]{0}', space=vmem, size = 0x4000, scoped, tag = 'input window, operand 0']
    #allocation3 [shape = 's32[2]{0}', space=sflag, size = 0x8, scoped, tag = 'scoped memory for tpu_custom_call.1']
    #allocation4 [shape = 's32[2]{0}', space=sflag, size = 0x8, scoped, tag = 'scoped memory for tpu_custom_call.1']
    #allocation5 [shape = 'u8[131072]{0}', space=vmem, size = 0x20000, scoped, tag = 'input window, operand 1']
    #allocation6 [shape = 's32[2]{0}', space=sflag, size = 0x8, scoped, tag = 'scoped memory for tpu_custom_call.1']
    #allocation7 [shape = 'u8[131072]{0}', space=vmem, size = 0x20000, scoped, tag = 'input window, operand 2']
    #allocation8 [shape = 'u8[16384]{0}', space=vmem, size = 0x4000, scoped, tag = 'output window, operand 0']
    #allocation9 [shape = 'u8[16384]{0}', space=vmem, size = 0x4000, scoped, tag = 'output window, operand 1']
    #allocation10 [shape = 's32[2]{0}', space=sflag, size = 0x8, scoped, tag = 'scoped memory for tpu_custom_call.1']
    %10 = vsyncpa [#allocation3], 0
    %s11 = scalar_lea.sflag [#allocation3], 1
    %12 = vsyncpa %s11, 0
    %13 = vsyncpa [#allocation6], 0
    %s14 = scalar_lea.sflag [#allocation6], 1
    %15 = vsyncpa %s14, 0
    %16 = vsyncpa [#allocation4], 0
    %s17 = scalar_lea.sflag [#allocation4], 1
    %18 = vsyncpa %s17, 0
    %19 = vsyncpa [#allocation10], 0
    %s20 = scalar_lea.sflag [#allocation10], 1
    %21 = vsyncpa %s20, 0
    loop: start=0, step=1, limit=4
    $region2: #{tpu_custom_call.1} parent=1 // loop_pre_header
      _
    $region3: #{tpu_custom_call.1} parent=1 // loop_header
      %s23 = sphi 0, %s27
      %p24 = scmp.ge.s32.totalorder %s23, 4
      %s30 = sphi 0, %s42
      %s31 = sphi 0, %s38
      %s32 = sphi 0, %s30
      %s33 = sphi 0, %s31
      %s34 = sphi 0, %s32
      %s35 = sphi 0, %s33
      %s47 = sphi 0, %s49
      %s50 = sphi 0, %s47
      %s51 = sphi 0, %s50
      %s67 = sphi 0, %s51
      %s73 = sphi 0, %s75
      %s76 = sphi 0, %s73
      %s77 = sphi 0, %s76
      %s93 = sphi 0, %s77
      %s99 = sphi 0, %s101
      %s102 = sphi 0, %s99
      %s103 = sphi 0, %s102
      %s119 = sphi 0, %s103
      %s127 = sphi 0, %s129
      %s130 = sphi 0, %s127
      %s131 = sphi 0, %s130
      %s147 = sphi 0, %s131
      %s155 = sphi 0, %s157
      %s158 = sphi 0, %s155
      %s159 = sphi 0, %s158
      %s175 = sphi 0, %s159
    $region4: #{tpu_custom_call.1} parent=1 // loop_header_branch
      %26 = sbr.rel (%p24) target = $region8
    $region5: #{tpu_custom_call.1} parent=1 // loop_body
      %s28 = ssub.s32 %s23, 1
      %s29 = ssub.s32 %s23, 2
      %s36 = sadd.s32 1, %s31
      %p37 = scmp.ge.s32.totalorder %s36, 1
      %s38 = scalar_select %p37, 0, %s36
      %s39 = sadd.s32 1, %s30
      %s40 = scalar_select %p37, %s39, %s30
      %p41 = scmp.ge.s32.totalorder %s40, 2
      %s42 = scalar_select %p41, 0, %s40
      %s43 = ssub.s32 %s30, %s42
      %s44 = ssub.s32 %s31, %s38
      %s45 = sor.u32 %s43, %s44
      %p46 = scmp.eq.s32.totalorder %s45, 0
      %s48 = sadd.s32 %s47, 1
      %s49 = scalar_select %p46, %s47, %s48
      %p52 = pneg %p46
      %p53 = scmp.eq.s32.totalorder %s23, 1
      %p54 = por %p52, %p53
      %p55 = scmp.ne.s32.totalorder %s47, %s50
      %p56 = scmp.eq.s32.totalorder %s23, 0
      %p57 = por %p55, %p56
      %p58 = scmp.ne.s32.totalorder %s47, %s50
      %p59 = scmp.eq.s32.totalorder %s28, 1
      %p60 = por %p58, %p59
      %p61 = scmp.ne.s32.totalorder %s50, %s51
      %p62 = scmp.eq.s32.totalorder %s28, 0
      %p63 = por %p61, %p62
      %p64 = scmp.ne.s32.totalorder %s50, %s51
      %p65 = scmp.eq.s32.totalorder %s29, 1
      %p66 = por %p64, %p65
      %p68 = scmp.ne.s32.totalorder %s51, %s67
      %p69 = scmp.eq.s32.totalorder %s29, 0
      %p70 = por %p68, %p69
      %s71 = ssub.s32 %s30, %s42
      %p72 = scmp.eq.s32.totalorder %s71, 0
      %s74 = sadd.s32 %s73, 1
      %s75 = scalar_select %p72, %s73, %s74
      %p78 = pneg %p72
      %p79 = scmp.eq.s32.totalorder %s23, 1
      %p80 = por %p78, %p79
      %p81 = scmp.ne.s32.totalorder %s73, %s76
      %p82 = scmp.eq.s32.totalorder %s23, 0
      %p83 = por %p81, %p82
      %p84 = scmp.ne.s32.totalorder %s73, %s76
      %p85 = scmp.eq.s32.totalorder %s28, 1
      %p86 = por %p84, %p85
      %p87 = scmp.ne.s32.totalorder %s76, %s77
      %p88 = scmp.eq.s32.totalorder %s28, 0
      %p89 = por %p87, %p88
      %p90 = scmp.ne.s32.totalorder %s76, %s77
      %p91 = scmp.eq.s32.totalorder %s29, 1
      %p92 = por %p90, %p91
      %p94 = scmp.ne.s32.totalorder %s77, %s93
      %p95 = scmp.eq.s32.totalorder %s29, 0
      %p96 = por %p94, %p95
      %s97 = ssub.s32 %s30, %s42
      %p98 = scmp.eq.s32.totalorder %s97, 0
      %s100 = sadd.s32 %s99, 1
      %s101 = scalar_select %p98, %s99, %s100
      %p104 = pneg %p98
      %p105 = scmp.eq.s32.totalorder %s23, 1
      %p106 = por %p104, %p105
      %p107 = scmp.ne.s32.totalorder %s99, %s102
      %p108 = scmp.eq.s32.totalorder %s23, 0
      %p109 = por %p107, %p108
      %p110 = scmp.ne.s32.totalorder %s99, %s102
      %p111 = scmp.eq.s32.totalorder %s28, 1
      %p112 = por %p110, %p111
      %p113 = scmp.ne.s32.totalorder %s102, %s103
      %p114 = scmp.eq.s32.totalorder %s28, 0
      %p115 = por %p113, %p114
      %p116 = scmp.ne.s32.totalorder %s102, %s103
      %p117 = scmp.eq.s32.totalorder %s29, 1
      %p118 = por %p116, %p117
      %p120 = scmp.ne.s32.totalorder %s103, %s119
      %p121 = scmp.eq.s32.totalorder %s29, 0
      %p122 = por %p120, %p121
      %s123 = ssub.s32 %s30, %s42
      %s124 = ssub.s32 %s31, %s38
      %s125 = sor.u32 %s123, %s124
      %p126 = scmp.eq.s32.totalorder %s125, 0
      %s128 = sadd.s32 %s127, 1
      %s129 = scalar_select %p126, %s127, %s128
      %p132 = pneg %p126
      %p133 = scmp.eq.s32.totalorder %s23, 1
      %p134 = por %p132, %p133
      %p135 = scmp.ne.s32.totalorder %s127, %s130
      %p136 = scmp.eq.s32.totalorder %s23, 0
      %p137 = por %p135, %p136
      %p138 = scmp.ne.s32.totalorder %s127, %s130
      %p139 = scmp.eq.s32.totalorder %s28, 1
      %p140 = por %p138, %p139
      %p141 = scmp.ne.s32.totalorder %s130, %s131
      %p142 = scmp.eq.s32.totalorder %s28, 0
      %p143 = por %p141, %p142
      %p144 = scmp.ne.s32.totalorder %s130, %s131
      %p145 = scmp.eq.s32.totalorder %s29, 1
      %p146 = por %p144, %p145
      %p148 = scmp.ne.s32.totalorder %s131, %s147
      %p149 = scmp.eq.s32.totalorder %s29, 0
      %p150 = por %p148, %p149
      %s151 = ssub.s32 %s30, %s42
      %s152 = ssub.s32 %s31, %s38
      %s153 = sor.u32 %s151, %s152
      %p154 = scmp.eq.s32.totalorder %s153, 0
      %s156 = sadd.s32 %s155, 1
      %s157 = scalar_select %p154, %s155, %s156
      %p160 = pneg %p154
      %p161 = scmp.eq.s32.totalorder %s23, 1
      %p162 = por %p160, %p161
      %p163 = scmp.ne.s32.totalorder %s155, %s158
      %p164 = scmp.eq.s32.totalorder %s23, 0
      %p165 = por %p163, %p164
      %p166 = scmp.ne.s32.totalorder %s155, %s158
      %p167 = scmp.eq.s32.totalorder %s28, 1
      %p168 = por %p166, %p167
      %p169 = scmp.ne.s32.totalorder %s158, %s159
      %p170 = scmp.eq.s32.totalorder %s28, 0
      %p171 = por %p169, %p170
      %p172 = scmp.ne.s32.totalorder %s158, %s159
      %p173 = scmp.eq.s32.totalorder %s29, 1
      %p174 = por %p172, %p173
      %p176 = scmp.ne.s32.totalorder %s159, %s175
      %p177 = scmp.eq.s32.totalorder %s29, 0
      %p178 = por %p176, %p177
      %p179 = scmp.le.s32.totalorder 1, %s23
      %p180 = scmp.lt.s32.totalorder %s23, 3
      %p181 = pnand %p179, %p180
      %p182 = pneg %p181
      // Predicated region
      $region9: #{tpu_custom_call.1} parent=5 // pred_check
        _
      $region10: #{tpu_custom_call.1} parent=5 // pred_check_branch
        %184 = sbr.rel (%p181) target = $region12
      $region11: #{tpu_custom_call.1} parent=5 // pred_region
        %s185 = ssub.s32 %s23, 1
      $region12: #{tpu_custom_call.1} parent=5 // pred_fallthru
        _
      %p186 = scmp.lt.s32.totalorder %s23, 2
      // Predicated region
      $region13: #{tpu_custom_call.1} parent=5 // pred_check
        %p187 = pneg %p186
      $region14: #{tpu_custom_call.1} parent=5 // pred_check_branch
        %189 = sbr.rel (%p187) target = $region16
      $region15: #{tpu_custom_call.1} parent=5 // pred_region
        // Predicated region
        $region17: #{tpu_custom_call.1} parent=15 // pred_check
          %p190 = pneg %p57
        $region18: #{tpu_custom_call.1} parent=15 // pred_check_branch
          %192 = sbr.rel (%p190) target = $region20
        $region19: #{tpu_custom_call.1} parent=15 // pred_region
          %s193 = sand.u32 %s47, 1
          %s194 = scalar_lea.sflag [#allocation3], %s193
          %s195 = sand.u32 %s47, 1
          %s196 = smul.addr %s195, 16
          %s197 = scalar_lea.vmem [#allocation2], %s196
          %s198 = smul.u32 2, %s31
          %s200 = ssub.s32 256, 256
          %201 = vsyncadd %s194, %s200
          %s202 = smul.addr %s30, 2
          %s203 = sadd.s32 %s198, %s202
          %s204 = smul.addr %s203, 128
          %s205 = scalar_lea.hbm %s0, %s204
          %s206 = sshll.u32 %s197, 4
          %s207 = int_to_ptr.vmem [resolvable:$true] %s206
          %212 = dma.hbm_to_vmem [thread:$0]  %s205, 256, %s207, %s194, 128, 128, 8
        $region20: #{tpu_custom_call.1} parent=15 // pred_fallthru
          _
        // Predicated region
        $region21: #{tpu_custom_call.1} parent=15 // pred_check
          %p213 = pneg %p83
        $region22: #{tpu_custom_call.1} parent=15 // pred_check_branch
          %215 = sbr.rel (%p213) target = $region24
        $region23: #{tpu_custom_call.1} parent=15 // pred_region
          %s216 = sand.u32 %s23, 1
          %s217 = scalar_lea.sflag [#allocation6], %s216
          %s218 = sand.u32 %s73, 1
          %s219 = smul.addr %s218, 128
          %s220 = scalar_lea.vmem [#allocation5], %s219
          %s222 = ssub.s32 2048, 2048
          %223 = vsyncadd %s217, %s222
          %s224 = smul.addr %s30, 16
          %s225 = smul.addr %s224, 128
          %s226 = scalar_lea.hbm %s1, %s225
          %s227 = sshll.u32 %s220, 4
          %s228 = int_to_ptr.vmem [resolvable:$true] %s227
          %233 = dma.hbm_to_vmem [thread:$0]  %s226, 2048, %s228, %s217, 128, 128, 8
        $region24: #{tpu_custom_call.1} parent=15 // pred_fallthru
          _
        // Predicated region
        $region25: #{tpu_custom_call.1} parent=15 // pred_check
          %p234 = pneg %p109
        $region26: #{tpu_custom_call.1} parent=15 // pred_check_branch
          %236 = sbr.rel (%p234) target = $region28
        $region27: #{tpu_custom_call.1} parent=15 // pred_region
          %s237 = sand.u32 %s23, 1
          %s238 = scalar_lea.sflag [#allocation6], %s237
          %s239 = sand.u32 %s99, 1
          %s240 = smul.addr %s239, 128
          %s241 = scalar_lea.vmem [#allocation7], %s240
          %s243 = ssub.s32 2048, 2048
          %244 = vsyncadd %s238, %s243
          %s245 = smul.addr %s30, 16
          %s246 = smul.addr %s245, 128
          %s247 = scalar_lea.hbm %s2, %s246
          %s248 = sshll.u32 %s241, 4
          %s249 = int_to_ptr.vmem [resolvable:$true] %s248
          %254 = dma.hbm_to_vmem [thread:$0]  %s247, 2048, %s249, %s238, 128, 128, 8
        $region28: #{tpu_custom_call.1} parent=15 // pred_fallthru
          _
      $region16: #{tpu_custom_call.1} parent=5 // pred_fallthru
        _
      %p255 = scmp.le.s32.totalorder 1, %s23
      %p256 = scmp.lt.s32.totalorder %s23, 3
      %p257 = pnand %p255, %p256
      %p258 = pneg %p257
      // Predicated region
      $region29: #{tpu_custom_call.1} parent=5 // pred_check
        _
      $region30: #{tpu_custom_call.1} parent=5 // pred_check_branch
        %260 = sbr.rel (%p257) target = $region32
      $region31: #{tpu_custom_call.1} parent=5 // pred_region
        %s261 = ssub.s32 %s23, 1
        %s262 = sand.u32 %s50, 1
        %s263 = scalar_lea.sflag [#allocation3], %s262
        %s264 = sand.u32 %s50, 1
        %s265 = smul.addr %s264, 16
        %s266 = scalar_lea.vmem [#allocation2], %s265
        // Predicated region
        $region33: #{tpu_custom_call.1} parent=31 // pred_check
          %p267 = pneg %p63
        $region34: #{tpu_custom_call.1} parent=31 // pred_check_branch
          %269 = sbr.rel (%p267) target = $region36
        $region35: #{tpu_custom_call.1} parent=31 // pred_region
          %270 = dma.done %s263, 256
        $region36: #{tpu_custom_call.1} parent=31 // pred_fallthru
          _
        %s271 = sand.u32 %s28, 1
        %s272 = scalar_lea.sflag [#allocation6], %s271
        %s273 = sand.u32 %s76, 1
        %s274 = smul.addr %s273, 128
        %s275 = scalar_lea.vmem [#allocation5], %s274
        // Predicated region
        $region37: #{tpu_custom_call.1} parent=31 // pred_check
          %p276 = pneg %p89
        $region38: #{tpu_custom_call.1} parent=31 // pred_check_branch
          %278 = sbr.rel (%p276) target = $region40
        $region39: #{tpu_custom_call.1} parent=31 // pred_region
          %279 = dma.done %s272, 2048
        $region40: #{tpu_custom_call.1} parent=31 // pred_fallthru
          _
        %s280 = sand.u32 %s28, 1
        %s281 = scalar_lea.sflag [#allocation6], %s280
        %s282 = sand.u32 %s102, 1
        %s283 = smul.addr %s282, 128
        %s284 = scalar_lea.vmem [#allocation7], %s283
        // Predicated region
        $region41: #{tpu_custom_call.1} parent=31 // pred_check
          %p285 = pneg %p115
        $region42: #{tpu_custom_call.1} parent=31 // pred_check_branch
          %287 = sbr.rel (%p285) target = $region44
        $region43: #{tpu_custom_call.1} parent=31 // pred_region
          %288 = dma.done %s281, 2048
        $region44: #{tpu_custom_call.1} parent=31 // pred_fallthru
          _
        %s289 = sand.u32 %s50, 1
        %s290 = scalar_lea.sflag [#allocation3], %s289
        %s291 = sand.u32 %s50, 1
        %s292 = smul.addr %s291, 16
        %s293 = scalar_lea.vmem [#allocation2], %s292
        %p294 = pneg %p63
        %p295 = pneg %p60
        %s296 = sand.u32 %s28, 1
        %s297 = scalar_lea.sflag [#allocation6], %s296
        %s298 = sand.u32 %s76, 1
        %s299 = smul.addr %s298, 128
        %s300 = scalar_lea.vmem [#allocation5], %s299
        %p301 = pneg %p89
        %p302 = pneg %p86
        %s303 = sand.u32 %s28, 1
        %s304 = scalar_lea.sflag [#allocation6], %s303
        %s305 = sand.u32 %s102, 1
        %s306 = smul.addr %s305, 128
        %s307 = scalar_lea.vmem [#allocation7], %s306
        %p308 = pneg %p115
        %p309 = pneg %p112
        %p310 = pneg %p143
        %p311 = pneg %p140
        %s312 = sand.u32 %s130, 1
        %s313 = scalar_lea.sflag [#allocation4], %s312
        %s314 = sand.u32 %s130, 1
        %s315 = smul.addr %s314, 16
        %s316 = scalar_lea.vmem [#allocation8], %s315
        %p317 = pneg %p171
        %p318 = pneg %p168
        %s319 = sand.u32 %s158, 1
        %s320 = scalar_lea.sflag [#allocation10], %s319
        %s321 = sand.u32 %s158, 1
        %s322 = smul.addr %s321, 16
        %s323 = scalar_lea.vmem [#allocation9], %s322
        %s324 = smul.u32 2, %s33
        %s325 = smul.u32 2, %s33
        %s326 = smul.u32 2, %s33
        %v327 = vld [vmem:[%s266] sm:$0xff]
        %v328 = vld [vmem:[%s266 + $0x8] sm:$0xff]
        %v329 = vld [vmem:[%s275] sm:$0xff]
        %v330 = vld [vmem:[%s275 + $0x8] sm:$0xff]
        %v331 = vld [vmem:[%s275 + $0x10] sm:$0xff]
        %v332 = vld [vmem:[%s275 + $0x18] sm:$0xff]
        %v333 = vld [vmem:[%s275 + $0x20] sm:$0xff]
        %v334 = vld [vmem:[%s275 + $0x28] sm:$0xff]
        %v335 = vld [vmem:[%s275 + $0x30] sm:$0xff]
        %v336 = vld [vmem:[%s275 + $0x38] sm:$0xff]
        %v337 = vld [vmem:[%s275 + $0x40] sm:$0xff]
        %v338 = vld [vmem:[%s275 + $0x48] sm:$0xff]
        %v339 = vld [vmem:[%s275 + $0x50] sm:$0xff]
        %v340 = vld [vmem:[%s275 + $0x58] sm:$0xff]
        %v341 = vld [vmem:[%s275 + $0x60] sm:$0xff]
        %v342 = vld [vmem:[%s275 + $0x68] sm:$0xff]
        %v343 = vld [vmem:[%s275 + $0x70] sm:$0xff]
        %v344 = vld [vmem:[%s275 + $0x78] sm:$0xff]
        %v345 = vld [vmem:[%s284] sm:$0xff]
        %v346 = vld [vmem:[%s284 + $0x8] sm:$0xff]
        %v347 = vld [vmem:[%s284 + $0x10] sm:$0xff]
        %v348 = vld [vmem:[%s284 + $0x18] sm:$0xff]
        %v349 = vld [vmem:[%s284 + $0x20] sm:$0xff]
        %v350 = vld [vmem:[%s284 + $0x28] sm:$0xff]
        %v351 = vld [vmem:[%s284 + $0x30] sm:$0xff]
        %v352 = vld [vmem:[%s284 + $0x38] sm:$0xff]
        %v353 = vld [vmem:[%s284 + $0x40] sm:$0xff]
        %v354 = vld [vmem:[%s284 + $0x48] sm:$0xff]
        %v355 = vld [vmem:[%s284 + $0x50] sm:$0xff]
        %v356 = vld [vmem:[%s284 + $0x58] sm:$0xff]
        %v357 = vld [vmem:[%s284 + $0x60] sm:$0xff]
        %v358 = vld [vmem:[%s284 + $0x68] sm:$0xff]
        %v359 = vld [vmem:[%s284 + $0x70] sm:$0xff]
        %v360 = vld [vmem:[%s284 + $0x78] sm:$0xff]
        %361 = vmatprep.subr.mxu0 0.0
        %362 = vmatpush1.xpose.msra.mxu0 %v329
        %363 = vmatprep.subr.mxu0 0.0
        %364 = vmatpush1.xpose.msra.mxu0 %v330
        %365 = vmatprep.subr.mxu0 0.0
        %366 = vmatpush1.xpose.msra.mxu0 %v331
        %367 = vmatprep.subr.mxu0 0.0
        %368 = vmatpush1.xpose.msra.mxu0 %v332
        %369 = vmatprep.subr.mxu0 0.0
        %370 = vmatpush1.xpose.msra.mxu0 %v333
        %371 = vmatprep.subr.mxu0 0.0
        %372 = vmatpush1.xpose.msra.mxu0 %v334
        %373 = vmatprep.subr.mxu0 0.0
        %374 = vmatpush1.xpose.msra.mxu0 %v335
        %375 = vmatprep.subr.mxu0 0.0
        %376 = vmatpush1.xpose.msra.mxu0 %v336
        %377 = vmatprep.subr.mxu0 0.0
        %378 = vmatpush1.xpose.msra.mxu0 %v337
        %379 = vmatprep.subr.mxu0 0.0
        %380 = vmatpush1.xpose.msra.mxu0 %v338
        %381 = vmatprep.subr.mxu0 0.0
        %382 = vmatpush1.xpose.msra.mxu0 %v339
        %383 = vmatprep.subr.mxu0 0.0
        %384 = vmatpush1.xpose.msra.mxu0 %v340
        %385 = vmatprep.subr.mxu0 0.0
        %386 = vmatpush1.xpose.msra.mxu0 %v341
        %387 = vmatprep.subr.mxu0 0.0
        %388 = vmatpush1.xpose.msra.mxu0 %v342
        %389 = vmatprep.subr.mxu0 0.0
        %390 = vmatpush1.xpose.msra.mxu0 %v343
        %391 = vmatprep.subr.mxu0 0.0
        %392 = vmatpush1.xpose.msra.mxu0 %v344
        %393 = vmatprep.subr.mxu0 0.0
        %394 = vmatpush1.xpose.msra.mxu0 0.0
        %395 = vmatprep.subr.mxu0 0.0
        %396 = vmatpush1.xpose.msra.mxu0 0.0
        %397 = vmatprep.subr.mxu0 0.0
        %398 = vmatpush1.xpose.msra.mxu0 0.0
        %399 = vmatprep.subr.mxu0 0.0
        %400 = vmatpush1.xpose.msra.mxu0 0.0
        %401 = vmatprep.subr.mxu0 0.0
        %402 = vmatpush1.xpose.msra.mxu0 0.0
        %403 = vmatprep.subr.mxu0 0.0
        %404 = vmatpush1.xpose.msra.mxu0 0.0
        %405 = vmatprep.subr.mxu0 0.0
        %406 = vmatpush1.xpose.msra.mxu0 0.0
        %407 = vmatprep.subr.mxu0 0.0
        %408 = vmatpush1.xpose.msra.mxu0 0.0
        %409 = vmatprep.subr.mxu0 0.0
        %410 = vmatpush1.xpose.msra.mxu0 0.0
        %411 = vmatprep.subr.mxu0 0.0
        %412 = vmatpush1.xpose.msra.mxu0 0.0
        %413 = vmatprep.subr.mxu0 0.0
        %414 = vmatpush1.xpose.msra.mxu0 0.0
        %415 = vmatprep.subr.mxu0 0.0
        %416 = vmatpush1.xpose.msra.mxu0 0.0
        %417 = vmatprep.subr.mxu0 0.0
        %418 = vmatpush1.xpose.msra.mxu0 0.0
        %419 = vmatprep.subr.mxu0 0.0
        %420 = vmatpush1.xpose.msra.mxu0 0.0
        %421 = vmatprep.subr.mxu0 0.0
        %422 = vmatpush1.xpose.msra.mxu0 0.0
        %423 = vmatprep.subr.mxu0 0.0
        %424 = vmatpush1.xpose.msra.mxu0 0.0
        %425 = vmatprep.mubr.f32.mxu0 0.0
        %426 = vmatmul.mubr.f32.gmra.mrb[0].mxu0 %v327
        %v427 = vpop.f32.mrb[0].mxu0
        %v428 = vadd.f32 0.0, %v427
        %v429 = vpop.f32.mrb[0].mxu0
        %430 = vmatprep.mubr.f32.mxu0 0.0
        %431 = vmatmul.mubr.f32.gmra.mrb[0].mxu0 %v328
        %v432 = vpop.f32.mrb[0].mxu0
        %v433 = vadd.f32 0.0, %v432
        %v434 = vpop.f32.mrb[0].mxu0
        %435 = vdwg.mxu0
        %v436 = vmul.f32 %v428, 0.088388346
        %v437 = vmul.f32 %v433, 0.088388346
        %438 = vmax.xlane.f32.xlu0 %v436
        %v439 = vpop.xlane.xlu0 %438
        %440 = vmax.xlane.f32.xlu0 %v437
        %v441 = vpop.xlane.xlu0 %440
        %v442 = vsub.f32 %v436, %v439
        %v443 = vsub.f32 %v437, %v441
        %v444 = vmul.f32 %v442, 1.442695
        %v445 = vpow.pop %v444
        %v446 = vmul.f32 %v443, 1.442695
        %v447 = vpow.pop %v446
        %448 = vadd.xlane.f32.xlu0 %v445
        %v449 = vpop.xlane.xlu0 %448
        %450 = vadd.xlane.f32.xlu0 %v447
        %v451 = vpop.xlane.xlu0 %450
        %v452 = vrcp.pop %v449
        %v453 = vmul.f32 %v445, %v452
        %v454 = vrcp.pop %v451
        %v455 = vmul.f32 %v447, %v454
        %456 = vst [vmem:[%s316] sm:$0xff] %v453
        %457 = vst [vmem:[%s316 + $0x8] sm:$0xff] %v455
        %458 = vmatprep.subr.mxu0 0.0
        %459 = vmatpush1.msra.mxu0 %v345
        %460 = vmatprep.subr.mxu0 0.0
        %461 = vmatpush1.msra.mxu0 %v346
        %462 = vmatprep.subr.mxu0 0.0
        %463 = vmatpush1.msra.mxu0 %v347
        %464 = vmatprep.subr.mxu0 0.0
        %465 = vmatpush1.msra.mxu0 %v348
        %466 = vmatprep.subr.mxu0 0.0
        %467 = vmatpush1.msra.mxu0 %v349
        %468 = vmatprep.subr.mxu0 0.0
        %469 = vmatpush1.msra.mxu0 %v350
        %470 = vmatprep.subr.mxu0 0.0
        %471 = vmatpush1.msra.mxu0 %v351
        %472 = vmatprep.subr.mxu0 0.0
        %473 = vmatpush1.msra.mxu0 %v352
        %474 = vmatprep.subr.mxu0 0.0
        %475 = vmatpush1.msra.mxu0 %v353
        %476 = vmatprep.subr.mxu0 0.0
        %477 = vmatpush1.msra.mxu0 %v354
        %478 = vmatprep.subr.mxu0 0.0
        %479 = vmatpush1.msra.mxu0 %v355
        %480 = vmatprep.subr.mxu0 0.0
        %481 = vmatpush1.msra.mxu0 %v356
        %482 = vmatprep.subr.mxu0 0.0
        %483 = vmatpush1.msra.mxu0 %v357
        %484 = vmatprep.subr.mxu0 0.0
        %485 = vmatpush1.msra.mxu0 %v358
        %486 = vmatprep.subr.mxu0 0.0
        %487 = vmatpush1.msra.mxu0 %v359
        %488 = vmatprep.subr.mxu0 0.0
        %489 = vmatpush1.msra.mxu0 %v360
        %490 = vmatprep.subr.mxu0 0.0
        %491 = vmatpush1.msra.mxu0 0.0
        %492 = vmatprep.subr.mxu0 0.0
        %493 = vmatpush1.msra.mxu0 0.0
        %494 = vmatprep.subr.mxu0 0.0
        %495 = vmatpush1.msra.mxu0 0.0
        %496 = vmatprep.subr.mxu0 0.0
        %497 = vmatpush1.msra.mxu0 0.0
        %498 = vmatprep.subr.mxu0 0.0
        %499 = vmatpush1.msra.mxu0 0.0
        %500 = vmatprep.subr.mxu0 0.0
        %501 = vmatpush1.msra.mxu0 0.0
        %502 = vmatprep.subr.mxu0 0.0
        %503 = vmatpush1.msra.mxu0 0.0
        %504 = vmatprep.subr.mxu0 0.0
        %505 = vmatpush1.msra.mxu0 0.0
        %506 = vmatprep.subr.mxu0 0.0
        %507 = vmatpush1.msra.mxu0 0.0
        %508 = vmatprep.subr.mxu0 0.0
        %509 = vmatpush1.msra.mxu0 0.0
        %510 = vmatprep.subr.mxu0 0.0
        %511 = vmatpush1.msra.mxu0 0.0
        %512 = vmatprep.subr.mxu0 0.0
        %513 = vmatpush1.msra.mxu0 0.0
        %514 = vmatprep.subr.mxu0 0.0
        %515 = vmatpush1.msra.mxu0 0.0
        %516 = vmatprep.subr.mxu0 0.0
        %517 = vmatpush1.msra.mxu0 0.0
        %518 = vmatprep.subr.mxu0 0.0
        %519 = vmatpush1.msra.mxu0 0.0
        %520 = vmatprep.subr.mxu0 0.0
        %521 = vmatpush1.msra.mxu0 0.0
        %522 = vmatprep.mubr.f32.mxu0 0.0
        %523 = vmatmul.mubr.f32.gmra.mrb[0].mxu0 %v453
        %v524 = vpop.f32.mrb[0].mxu0
        %v525 = vadd.f32 0.0, %v524
        %v526 = vpop.f32.mrb[0].mxu0
        %527 = vmatprep.mubr.f32.mxu0 0.0
        %528 = vmatmul.mubr.f32.gmra.mrb[0].mxu0 %v455
        %v529 = vpop.f32.mrb[0].mxu0
        %v530 = vadd.f32 0.0, %v529
        %v531 = vpop.f32.mrb[0].mxu0
        %532 = vdwg.mxu0
        %533 = vst [vmem:[%s323] sm:$0xff] %v525
        %534 = vst [vmem:[%s323 + $0x8] sm:$0xff] %v530
        %s535 = sand.u32 %s130, 1
        %s536 = scalar_lea.sflag [#allocation4], %s535
        %s537 = sand.u32 %s130, 1
        %s538 = smul.addr %s537, 16
        %s539 = scalar_lea.vmem [#allocation8], %s538
        %s540 = sand.u32 %s158, 1
        %s541 = scalar_lea.sflag [#allocation10], %s540
        %s542 = sand.u32 %s158, 1
        %s543 = smul.addr %s542, 16
        %s544 = scalar_lea.vmem [#allocation9], %s543
        // Predicated region
        $region45: #{tpu_custom_call.1} parent=31 // pred_check
          %p545 = pneg %p140
        $region46: #{tpu_custom_call.1} parent=31 // pred_check_branch
          %547 = sbr.rel (%p545) target = $region48
        $region47: #{tpu_custom_call.1} parent=31 // pred_region
          %s548 = smul.u32 2, %s33
          %s550 = ssub.s32 256, 256
          %551 = vsyncadd %s536, %s550
          %s552 = smul.addr %s32, 2
          %s553 = sadd.s32 %s548, %s552
          %s554 = smul.addr %s553, 128
          %s555 = scalar_lea.hbm %s3, %s554
          %s556 = sshll.u32 %s539, 4
          %s557 = int_to_ptr.vmem [resolvable:$true] %s556
          %562 = dma.vmem_to_hbm [thread:$0]  %s557, 256, %s555, %s536, 128, 128, 8
        $region48: #{tpu_custom_call.1} parent=31 // pred_fallthru
          _
        // Predicated region
        $region49: #{tpu_custom_call.1} parent=31 // pred_check
          %p563 = pneg %p168
        $region50: #{tpu_custom_call.1} parent=31 // pred_check_branch
          %565 = sbr.rel (%p563) target = $region52
        $region51: #{tpu_custom_call.1} parent=31 // pred_region
          %s566 = smul.u32 2, %s33
          %s568 = ssub.s32 256, 256
          %569 = vsyncadd %s541, %s568
          %s570 = smul.addr %s32, 2
          %s571 = sadd.s32 %s566, %s570
          %s572 = smul.addr %s571, 128
          %s573 = scalar_lea.hbm %s4, %s572
          %s574 = sshll.u32 %s544, 4
          %s575 = int_to_ptr.vmem [resolvable:$true] %s574
          %580 = dma.vmem_to_hbm [thread:$0]  %s575, 256, %s573, %s541, 128, 128, 8
        $region52: #{tpu_custom_call.1} parent=31 // pred_fallthru
          _
      $region32: #{tpu_custom_call.1} parent=5 // pred_fallthru
        _
      %p581 = scmp.le.s32.totalorder 2, %s23
      // Predicated region
      $region53: #{tpu_custom_call.1} parent=5 // pred_check
        %p582 = pneg %p581
      $region54: #{tpu_custom_call.1} parent=5 // pred_check_branch
        %584 = sbr.rel (%p582) target = $region56
      $region55: #{tpu_custom_call.1} parent=5 // pred_region
        %s585 = ssub.s32 %s23, 2
        // Predicated region
        $region57: #{tpu_custom_call.1} parent=55 // pred_check
          %p586 = pneg %p146
        $region58: #{tpu_custom_call.1} parent=55 // pred_check_branch
          %588 = sbr.rel (%p586) target = $region60
        $region59: #{tpu_custom_call.1} parent=55 // pred_region
          %s589 = sand.u32 %s131, 1
          %s590 = scalar_lea.sflag [#allocation4], %s589
          %s591 = sand.u32 %s131, 1
          %s592 = smul.addr %s591, 16
          %s593 = scalar_lea.vmem [#allocation8], %s592
          %594 = dma.done %s590, 256
        $region60: #{tpu_custom_call.1} parent=55 // pred_fallthru
          _
        // Predicated region
        $region61: #{tpu_custom_call.1} parent=55 // pred_check
          %p595 = pneg %p174
        $region62: #{tpu_custom_call.1} parent=55 // pred_check_branch
          %597 = sbr.rel (%p595) target = $region64
        $region63: #{tpu_custom_call.1} parent=55 // pred_region
          %s598 = sand.u32 %s159, 1
          %s599 = scalar_lea.sflag [#allocation10], %s598
          %s600 = sand.u32 %s159, 1
          %s601 = smul.addr %s600, 16
          %s602 = scalar_lea.vmem [#allocation9], %s601
          %603 = dma.done %s599, 256
        $region64: #{tpu_custom_call.1} parent=55 // pred_fallthru
          _
      $region56: #{tpu_custom_call.1} parent=5 // pred_fallthru
        _
    $region6: #{tpu_custom_call.1} parent=1 // loop_footer
      %s27 = sadd.s32 1, %s23
    $region7: #{tpu_custom_call.1} parent=1 // loop_footer_branch
      %22 = sbr.rel target = $region3
    $region8: #{tpu_custom_call.1} parent=1 // loop_exit
      _
    %604 = vsyncpa [#allocation3], 1
    %s605 = scalar_lea.sflag [#allocation3], 1
    %606 = vsyncpa %s605, 1
    %607 = vsyncpa [#allocation6], 1
    %s608 = scalar_lea.sflag [#allocation6], 1
    %609 = vsyncpa %s608, 1
    %610 = vsyncpa [#allocation4], 1
    %s611 = scalar_lea.sflag [#allocation4], 1
    %612 = vsyncpa %s611, 1
    %613 = vsyncpa [#allocation10], 1
    %s614 = scalar_lea.sflag [#allocation10], 1
    %615 = vsyncpa %s614, 1

</llo_original>
